<compile_context>
chip_gen: v6e
topology: v6e:2x2x1
jax: 0.10.0
libtpu: 0.0.40
codegen_flags: <defaults>
</compile_context>

<pallas_src>
import functools

import jax
import jax.numpy as jnp
from jax.experimental import pallas as pl
from jax.experimental.pallas import tpu as pltpu

KERNEL_SIZE = 3
PAD = KERNEL_SIZE // 2
NUM_TAPS = KERNEL_SIZE * KERNEL_SIZE


def _spatial_attention_kernel(w_ref, mask_ref, x_ref, o_ref, sum_ref, max_ref, *, H, W):
    # w_ref   : SMEM (18,) f32      conv weight, OIHW (1,2,3,3) flattened;
    #                               first 9 taps are pre-scaled by 1/C (sum -> mean)
    # mask_ref: VMEM (9, H*W) f32   multiplicative boundary mask per conv tap
    # x_ref   : VMEM (NB, CB, H*W)  input block (lane-dense), original dtype
    # o_ref   : VMEM (NB, H*W)      output block (lane-dense)
    # sum/max : VMEM (NB, H*W) f32  running channel-sum / channel-max accumulators
    HW = H * W
    NB = x_ref.shape[0]
    c_blk = pl.program_id(1)

    @pl.when(c_blk == 0)
    def _init():
        sum_ref[...] = jnp.zeros_like(sum_ref)
        max_ref[...] = jnp.full_like(max_ref, -jnp.inf)

    # Whole-block channel reduction: ~1 vld + 1 add + 1 max per input vreg, no
    # per-channel sublane slicing -> the accumulate pass stays HBM bound.
    x = x_ref[...].astype(jnp.float32)           # upcast AFTER the VMEM load (bf16 ok)
    sum_ref[...] = sum_ref[...] + jnp.sum(x, axis=1)
    max_ref[...] = jnp.maximum(max_ref[...], jnp.max(x, axis=1))

    @pl.when(c_blk == pl.num_programs(1) - 1)
    def _finalize():
        # Unrolled 3x3 cross-correlation (matches nn.Conv2d, no bias) via lane
        # rolls + precomputed multiplicative boundary masks.  Only `acc` stays
        # live across taps; sum/max are re-read from VMEM per tap to keep the
        # epilogue inside the vreg file even for large H*W.
        acc = jnp.zeros((NB, HW), jnp.float32)
        for dy in (-1, 0, 1):
            for dx in (-1, 0, 1):
                t = (dy + PAD) * KERNEL_SIZE + (dx + PAD)
                off = dy * W + dx
                m = mask_ref[t:t + 1, :]                       # (1, HW) float mask
                if off == 0:
                    s_tap = sum_ref[...]
                    x_tap = max_ref[...]
                else:
                    # shifted[:, p] == feat[:, (p + off) % HW]; wrapped lanes are
                    # zeroed by the multiplicative mask for this tap.
                    sh = (-off) % HW
                    s_tap = pltpu.roll(sum_ref[...], shift=sh, axis=1)
                    x_tap = pltpu.roll(max_ref[...], shift=sh, axis=1)
                acc = acc + (w_ref[t] * m) * s_tap + (w_ref[NUM_TAPS + t] * m) * x_tap
        # Exact sigmoid: exp and reciprocal both run on the EUP slot.
        o_ref[...] = (1.0 / (1.0 + jnp.exp(-acc))).astype(o_ref.dtype)


def _pick_block(total, max_size, *, align, prefer_splits=1):
    """Largest divisor d of `total` with d <= max_size and (d % align == 0 or d == total).

    Among fitting choices, prefer those leaving at least `prefer_splits` blocks
    (total // d >= prefer_splits) so v7x's second TensorCore gets work.  If no
    legal divisor fits `max_size`, return the smallest legal divisor (the caller
    re-derives the VMEM limit from the final block size, so nothing is silent).
    """
    legal = [d for d in range(1, total + 1)
             if total % d == 0 and (d % align == 0 or d == total)]
    fitting = [d for d in legal if d <= max_size]
    if not fitting:
        return min(legal)
    preferred = [d for d in fitting if total // d >= prefer_splits]
    return max(preferred) if preferred else max(fitting)


def spatial_attention(x, weight):
    """x: (N, C, H, W) float32/bfloat16, weight: (1, 2, 3, 3) -> (N, 1, H, W) x.dtype."""
    N, C, H, W = x.shape
    HW = H * W

    # Lane-dense view (free reshape) in the ORIGINAL dtype; the kernel upcasts.
    x_flat = x.reshape(N, C, HW)
    x_item = x.dtype.itemsize
    out_dtype = x.dtype
    out_item = jnp.dtype(out_dtype).itemsize

    # Conv weights, OIHW (1,2,3,3) -> (18,) f32; fold 1/C into the avg-channel
    # taps so the kernel never divides the running channel sum.
    w2 = weight.reshape(2, NUM_TAPS).astype(jnp.float32)
    w_flat = jnp.concatenate([w2[0] / C, w2[1]], axis=0)       # (18,)

    # Multiplicative boundary-mask planes, one per conv tap (host-side, tiny).
    pix = jnp.arange(HW, dtype=jnp.int32)
    row, col = pix // W, pix % W
    planes = []
    for dy in (-1, 0, 1):
        for dx in (-1, 0, 1):
            ok = (row + dy >= 0) & (row + dy < H) & (col + dx >= 0) & (col + dx < W)
            planes.append(ok.astype(jnp.float32))
    masks = jnp.stack(planes, axis=0)                          # (9, HW)

    # ---- generation-aware block sizing -----------------------------------
    try:
        phys_vmem = int(pltpu.get_tpu_info().vmem_capacity_bytes)
    except Exception:
        phys_vmem = 64 * 1024 * 1024          # v7x worst case
    vmem_cap = (phys_vmem * 3) // 4           # ~48 MiB on v7x, ~96 MiB on v5e/v6e
    x_target = min(16 * 1024 * 1024, vmem_cap // 4)

    # Alignment: cb (2nd-last dim of the x block) and nb (2nd-last dim of the
    # out block) must each be a multiple of 8 or equal the full dim.
    nb_floor = _pick_block(N, 1, align=8)                      # smallest legal batch block
    cb = _pick_block(C, max(1, x_target // (nb_floor * HW * x_item)), align=8)
    nb = _pick_block(N, max(nb_floor, x_target // (cb * HW * x_item)),
                     align=8, prefer_splits=2)
    grid = (N // nb, C // cb)

    # Real VMEM footprint (double-buffered inputs/outputs + resident scratch).
    x_block_b = nb * cb * HW * x_item
    out_block_b = nb * HW * out_item
    scratch_b = 2 * nb * HW * 4
    masks_b = NUM_TAPS * HW * 4
    slack_b = max(1 << 20, 6 * nb * HW * 4)   # epilogue temporaries / compiler scratch
    required = 2 * x_block_b + 2 * out_block_b + 2 * masks_b + scratch_b + slack_b
    if required > phys_vmem:
        raise ValueError(
            f"SpatialAttention tiling needs ~{required} B VMEM but the chip has "
            f"{phys_vmem} B; reduce H*W or pad N/C to friendlier sizes.")
    vmem_limit = int(max(required, min(32 * 1024 * 1024, vmem_cap)))

    kernel = functools.partial(_spatial_attention_kernel, H=H, W=W)

    grid_spec = pltpu.PrefetchScalarGridSpec(
        num_scalar_prefetch=0,
        grid=grid,
        in_specs=[
            pl.BlockSpec(memory_space=pltpu.MemorySpace.SMEM),       # conv weights (scalars)
            pl.BlockSpec((NUM_TAPS, HW), lambda n, c: (0, 0)),       # mask planes (resident)
            pl.BlockSpec((nb, cb, HW), lambda n, c: (n, c, 0)),      # x: batch x channel block
        ],
        out_specs=pl.BlockSpec((nb, HW), lambda n, c: (n, 0)),       # lane-dense output
        scratch_shapes=[
            pltpu.VMEM((nb, HW), jnp.float32),                       # running channel sum
            pltpu.VMEM((nb, HW), jnp.float32),                       # running channel max
        ],
    )

    cost = pl.CostEstimate(
        flops=int(2 * N * C * HW + 48 * N * HW),
        transcendentals=int(N * HW),
        bytes_accessed=int(N * C * HW * x_item + N * HW * out_item
                           + NUM_TAPS * HW * 4 + 2 * NUM_TAPS * 4),
    )

    out = pl.pallas_call(
        kernel,
        out_shape=jax.ShapeDtypeStruct((N, HW), out_dtype),
        grid_spec=grid_spec,
        compiler_params=pltpu.CompilerParams(
            # Batch blocks are independent ("parallel": sharded across the two
            # TensorCores on v7x); the channel axis carries the running sum/max
            # accumulators -> "arbitrary", and it is the last grid axis.
            dimension_semantics=("parallel", "arbitrary"),
            vmem_limit_bytes=vmem_limit,
        ),
        cost_estimate=cost,
    )(w_flat, masks, x_flat)

    return out.reshape(N, 1, H, W)


if __name__ == "__main__":
    key = jax.random.PRNGKey(0)
    kx, kw = jax.random.split(key)

    # Small shapes consistent with the module's forward: NCHW input.
    x = jax.random.normal(kx, (2, 4, 16, 16), dtype=jnp.float32)
    # Conv weight, shape (out=1, in=2, kH=3, kW=3), no bias.
    weight = 0.5 * jax.random.normal(kw, (1, 2, 3, 3), dtype=jnp.float32)

    out = spatial_attention(x, weight)
    out = jax.block_until_ready(out)

    # Pure-JAX reference (same semantics as the PyTorch module).
    avg = jnp.mean(x, axis=1, keepdims=True)
    mx = jnp.max(x, axis=1, keepdims=True)
    feat = jnp.concatenate([avg, mx], axis=1)
    ref = jax.lax.conv_general_dilated(
        feat, weight, window_strides=(1, 1), padding=[(PAD, PAD), (PAD, PAD)],
        dimension_numbers=("NCHW", "OIHW", "NCHW"))
    ref = jax.nn.sigmoid(ref)

    assert out.shape == (2, 1, 16, 16), out.shape
    max_err = float(jnp.max(jnp.abs(out - ref)))
    assert max_err < 1e-4, max_err
    print("KERNEL_OK")
</pallas_src>

<mosaic_0001>
module attributes {stable_mosaic.version = 11 : i64} {
  func.func @_spatial_attention_kernel(%arg0: i32, %arg1: i32, %arg2: memref<18xf32, #tpu.memory_space<smem>>, %arg3: memref<9x256xf32, #tpu.memory_space<vmem>>, %arg4: memref<2x4x256xf32, #tpu.memory_space<vmem>>, %arg5: memref<2x256xf32, #tpu.memory_space<vmem>>, %arg6: memref<2x256xf32, #tpu.memory_space<vmem>>, %arg7: memref<2x256xf32, #tpu.memory_space<vmem>>) attributes {dimension_semantics = [#tpu.dimension_semantics<parallel>, #tpu.dimension_semantics<arbitrary>], iteration_bounds = array<i64: 1, 1>, scalar_prefetch = 0 : i64, scratch_operands = 2 : i64, tpu.core_type = #tpu.core_type<tc>, window_params = [{transform_indices = @transform_0, window_bounds = array<i64: 18>}, {pipeline_mode = #tpu.pipeline_mode<synchronous>, transform_indices = @transform_1, window_bounds = array<i64: 9, 256>}, {transform_indices = @transform_2, window_bounds = array<i64: 2, 4, 256>}, {transform_indices = @transform_3, window_bounds = array<i64: 2, 256>}]} {
    %c0_i32 = arith.constant 0 : i32
    %0 = arith.cmpi eq, %arg1, %c0_i32 : i32
    %1 = arith.extui %0 : i1 to i32
    %c0_i32_0 = arith.constant 0 : i32
    %2 = arith.cmpi ne, %1, %c0_i32_0 : i32
    scf.if %2 {
      %cst_14 = arith.constant 0.000000e+00 : f32
      %15 = vector.broadcast %cst_14 : f32 to vector<2x256xf32>
      %c0_15 = arith.constant 0 : index
      %c0_16 = arith.constant 0 : index
      %16 = vector.load %arg6[%c0_15, %c0_16] : memref<2x256xf32, #tpu.memory_space<vmem>>, vector<2x256xf32>
      tpu.vector_store %arg6[%c0_15, %c0_16], %15 {strides = array<i32>} : memref<2x256xf32, #tpu.memory_space<vmem>>, vector<2x256xf32>,
      %cst_17 = arith.constant 0xFF800000 : f32
      %17 = vector.broadcast %cst_17 : f32 to vector<2x256xf32>
      %c0_18 = arith.constant 0 : index
      %c0_19 = arith.constant 0 : index
      %18 = vector.load %arg7[%c0_18, %c0_19] : memref<2x256xf32, #tpu.memory_space<vmem>>, vector<2x256xf32>
      tpu.vector_store %arg7[%c0_18, %c0_19], %17 {strides = array<i32>} : memref<2x256xf32, #tpu.memory_space<vmem>>, vector<2x256xf32>,
    } else {
    }
    %c0 = arith.constant 0 : index
    %c0_1 = arith.constant 0 : index
    %c0_2 = arith.constant 0 : index
    %3 = vector.load %arg4[%c0, %c0_1, %c0_2] : memref<2x4x256xf32, #tpu.memory_space<vmem>>, vector<2x4x256xf32>
    %c0_3 = arith.constant 0 : index
    %c0_4 = arith.constant 0 : index
    %4 = vector.load %arg6[%c0_3, %c0_4] : memref<2x256xf32, #tpu.memory_space<vmem>>, vector<2x256xf32>
    %cst = arith.constant dense<0.000000e+00> : vector<2x256xf32>
    %5 = vector.multi_reduction <add>, %3, %cst [1] : vector<2x4x256xf32> to vector<2x256xf32>
    %6 = arith.addf %4, %5 : vector<2x256xf32>
    %c0_5 = arith.constant 0 : index
    %c0_6 = arith.constant 0 : index
    %7 = vector.load %arg6[%c0_5, %c0_6] : memref<2x256xf32, #tpu.memory_space<vmem>>, vector<2x256xf32>
    tpu.vector_store %arg6[%c0_5, %c0_6], %6 {strides = array<i32>} : memref<2x256xf32, #tpu.memory_space<vmem>>, vector<2x256xf32>,
    %c0_7 = arith.constant 0 : index
    %c0_8 = arith.constant 0 : index
    %8 = vector.load %arg7[%c0_7, %c0_8] : memref<2x256xf32, #tpu.memory_space<vmem>>, vector<2x256xf32>
    %cst_9 = arith.constant dense<0xFF800000> : vector<2x256xf32>
    %9 = vector.multi_reduction <maximumf>, %3, %cst_9 [1] : vector<2x4x256xf32> to vector<2x256xf32>
    %10 = arith.maximumf %8, %9 : vector<2x256xf32>
    %c0_10 = arith.constant 0 : index
    %c0_11 = arith.constant 0 : index
    %11 = vector.load %arg7[%c0_10, %c0_11] : memref<2x256xf32, #tpu.memory_space<vmem>>, vector<2x256xf32>
    tpu.vector_store %arg7[%c0_10, %c0_11], %10 {strides = array<i32>} : memref<2x256xf32, #tpu.memory_space<vmem>>, vector<2x256xf32>,
    %c0_i32_12 = arith.constant 0 : i32
    %12 = arith.cmpi eq, %arg1, %c0_i32_12 : i32
    %13 = arith.extui %12 : i1 to i32
    %c0_i32_13 = arith.constant 0 : i32
    %14 = arith.cmpi ne, %13, %c0_i32_13 : i32
    scf.if %14 {
      %cst_14 = arith.constant 0.000000e+00 : f32
      %15 = vector.broadcast %cst_14 : f32 to vector<2x256xf32>
      %c0_15 = arith.constant 0 : index
      %c0_16 = arith.constant 0 : index
      %16 = vector.load %arg3[%c0_15, %c0_16] : memref<9x256xf32, #tpu.memory_space<vmem>>, vector<1x256xf32>
      %c0_17 = arith.constant 0 : index
      %c0_18 = arith.constant 0 : index
      %17 = vector.load %arg6[%c0_17, %c0_18] : memref<2x256xf32, #tpu.memory_space<vmem>>, vector<2x256xf32>
      %c17_i32 = arith.constant 17 : i32
      %18 = tpu.dynamic_rotate %17 by %c17_i32 dim 1 : vector<2x256xf32>, i32 -> vector<2x256xf32>
      %c0_19 = arith.constant 0 : index
      %c0_20 = arith.constant 0 : index
      %19 = vector.load %arg7[%c0_19, %c0_20] : memref<2x256xf32, #tpu.memory_space<vmem>>, vector<2x256xf32>
      %c17_i32_21 = arith.constant 17 : i32
      %20 = tpu.dynamic_rotate %19 by %c17_i32_21 dim 1 : vector<2x256xf32>, i32 -> vector<2x256xf32>
      %c0_22 = arith.constant 0 : index
      %21 = memref.load %arg2[%c0_22] : memref<18xf32, #tpu.memory_space<smem>>
      %22 = vector.broadcast %21 : f32 to vector<1x256xf32>
      %23 = arith.mulf %22, %16 : vector<1x256xf32>
      %24 = vector.broadcast %23 : vector<1x256xf32> to vector<2x256xf32>
      %25 = arith.mulf %24, %18 : vector<2x256xf32>
      %26 = arith.addf %15, %25 : vector<2x256xf32>
      %c9 = arith.constant 9 : index
      %27 = memref.load %arg2[%c9] : memref<18xf32, #tpu.memory_space<smem>>
      %28 = vector.broadcast %27 : f32 to vector<1x256xf32>
      %29 = arith.mulf %28, %16 : vector<1x256xf32>
      %30 = vector.broadcast %29 : vector<1x256xf32> to vector<2x256xf32>
      %31 = arith.mulf %30, %20 : vector<2x256xf32>
      %32 = arith.addf %26, %31 : vector<2x256xf32>
      %c1 = arith.constant 1 : index
      %c0_23 = arith.constant 0 : index
      %33 = vector.load %arg3[%c1, %c0_23] : memref<9x256xf32, #tpu.memory_space<vmem>>, vector<1x256xf32>
      %c0_24 = arith.constant 0 : index
      %c0_25 = arith.constant 0 : index
      %34 = vector.load %arg6[%c0_24, %c0_25] : memref<2x256xf32, #tpu.memory_space<vmem>>, vector<2x256xf32>
      %c16_i32 = arith.constant 16 : i32
      %35 = tpu.dynamic_rotate %34 by %c16_i32 dim 1 : vector<2x256xf32>, i32 -> vector<2x256xf32>
      %c0_26 = arith.constant 0 : index
      %c0_27 = arith.constant 0 : index
      %36 = vector.load %arg7[%c0_26, %c0_27] : memref<2x256xf32, #tpu.memory_space<vmem>>, vector<2x256xf32>
      %c16_i32_28 = arith.constant 16 : i32
      %37 = tpu.dynamic_rotate %36 by %c16_i32_28 dim 1 : vector<2x256xf32>, i32 -> vector<2x256xf32>
      %c1_29 = arith.constant 1 : index
      %38 = memref.load %arg2[%c1_29] : memref<18xf32, #tpu.memory_space<smem>>
      %39 = vector.broadcast %38 : f32 to vector<1x256xf32>
      %40 = arith.mulf %39, %33 : vector<1x256xf32>
      %41 = vector.broadcast %40 : vector<1x256xf32> to vector<2x256xf32>
      %42 = arith.mulf %41, %35 : vector<2x256xf32>
      %43 = arith.addf %32, %42 : vector<2x256xf32>
      %c10 = arith.constant 10 : index
      %44 = memref.load %arg2[%c10] : memref<18xf32, #tpu.memory_space<smem>>
      %45 = vector.broadcast %44 : f32 to vector<1x256xf32>
      %46 = arith.mulf %45, %33 : vector<1x256xf32>
      %47 = vector.broadcast %46 : vector<1x256xf32> to vector<2x256xf32>
      %48 = arith.mulf %47, %37 : vector<2x256xf32>
      %49 = arith.addf %43, %48 : vector<2x256xf32>
      %c2 = arith.constant 2 : index
      %c0_30 = arith.constant 0 : index
      %50 = vector.load %arg3[%c2, %c0_30] : memref<9x256xf32, #tpu.memory_space<vmem>>, vector<1x256xf32>
      %c0_31 = arith.constant 0 : index
      %c0_32 = arith.constant 0 : index
      %51 = vector.load %arg6[%c0_31, %c0_32] : memref<2x256xf32, #tpu.memory_space<vmem>>, vector<2x256xf32>
      %c15_i32 = arith.constant 15 : i32
      %52 = tpu.dynamic_rotate %51 by %c15_i32 dim 1 : vector<2x256xf32>, i32 -> vector<2x256xf32>
      %c0_33 = arith.constant 0 : index
      %c0_34 = arith.constant 0 : index
      %53 = vector.load %arg7[%c0_33, %c0_34] : memref<2x256xf32, #tpu.memory_space<vmem>>, vector<2x256xf32>
      %c15_i32_35 = arith.constant 15 : i32
      %54 = tpu.dynamic_rotate %53 by %c15_i32_35 dim 1 : vector<2x256xf32>, i32 -> vector<2x256xf32>
      %c2_36 = arith.constant 2 : index
      %55 = memref.load %arg2[%c2_36] : memref<18xf32, #tpu.memory_space<smem>>
      %56 = vector.broadcast %55 : f32 to vector<1x256xf32>
      %57 = arith.mulf %56, %50 : vector<1x256xf32>
      %58 = vector.broadcast %57 : vector<1x256xf32> to vector<2x256xf32>
      %59 = arith.mulf %58, %52 : vector<2x256xf32>
      %60 = arith.addf %49, %59 : vector<2x256xf32>
      %c11 = arith.constant 11 : index
      %61 = memref.load %arg2[%c11] : memref<18xf32, #tpu.memory_space<smem>>
      %62 = vector.broadcast %61 : f32 to vector<1x256xf32>
      %63 = arith.mulf %62, %50 : vector<1x256xf32>
      %64 = vector.broadcast %63 : vector<1x256xf32> to vector<2x256xf32>
      %65 = arith.mulf %64, %54 : vector<2x256xf32>
      %66 = arith.addf %60, %65 : vector<2x256xf32>
      %c3 = arith.constant 3 : index
      %c0_37 = arith.constant 0 : index
      %67 = vector.load %arg3[%c3, %c0_37] : memref<9x256xf32, #tpu.memory_space<vmem>>, vector<1x256xf32>
      %c0_38 = arith.constant 0 : index
      %c0_39 = arith.constant 0 : index
      %68 = vector.load %arg6[%c0_38, %c0_39] : memref<2x256xf32, #tpu.memory_space<vmem>>, vector<2x256xf32>
      %c1_i32 = arith.constant 1 : i32
      %69 = tpu.dynamic_rotate %68 by %c1_i32 dim 1 : vector<2x256xf32>, i32 -> vector<2x256xf32>
      %c0_40 = arith.constant 0 : index
      %c0_41 = arith.constant 0 : index
      %70 = vector.load %arg7[%c0_40, %c0_41] : memref<2x256xf32, #tpu.memory_space<vmem>>, vector<2x256xf32>
      %c1_i32_42 = arith.constant 1 : i32
      %71 = tpu.dynamic_rotate %70 by %c1_i32_42 dim 1 : vector<2x256xf32>, i32 -> vector<2x256xf32>
      %c3_43 = arith.constant 3 : index
      %72 = memref.load %arg2[%c3_43] : memref<18xf32, #tpu.memory_space<smem>>
      %73 = vector.broadcast %72 : f32 to vector<1x256xf32>
      %74 = arith.mulf %73, %67 : vector<1x256xf32>
      %75 = vector.broadcast %74 : vector<1x256xf32> to vector<2x256xf32>
      %76 = arith.mulf %75, %69 : vector<2x256xf32>
      %77 = arith.addf %66, %76 : vector<2x256xf32>
      %c12 = arith.constant 12 : index
      %78 = memref.load %arg2[%c12] : memref<18xf32, #tpu.memory_space<smem>>
      %79 = vector.broadcast %78 : f32 to vector<1x256xf32>
      %80 = arith.mulf %79, %67 : vector<1x256xf32>
      %81 = vector.broadcast %80 : vector<1x256xf32> to vector<2x256xf32>
      %82 = arith.mulf %81, %71 : vector<2x256xf32>
      %83 = arith.addf %77, %82 : vector<2x256xf32>
      %c4 = arith.constant 4 : index
      %c0_44 = arith.constant 0 : index
      %84 = vector.load %arg3[%c4, %c0_44] : memref<9x256xf32, #tpu.memory_space<vmem>>, vector<1x256xf32>
      %c0_45 = arith.constant 0 : index
      %c0_46 = arith.constant 0 : index
      %85 = vector.load %arg6[%c0_45, %c0_46] : memref<2x256xf32, #tpu.memory_space<vmem>>, vector<2x256xf32>
      %c0_47 = arith.constant 0 : index
      %c0_48 = arith.constant 0 : index
      %86 = vector.load %arg7[%c0_47, %c0_48] : memref<2x256xf32, #tpu.memory_space<vmem>>, vector<2x256xf32>
      %c4_49 = arith.constant 4 : index
      %87 = memref.load %arg2[%c4_49] : memref<18xf32, #tpu.memory_space<smem>>
      %88 = vector.broadcast %87 : f32 to vector<1x256xf32>
      %89 = arith.mulf %88, %84 : vector<1x256xf32>
      %90 = vector.broadcast %89 : vector<1x256xf32> to vector<2x256xf32>
      %91 = arith.mulf %90, %85 : vector<2x256xf32>
      %92 = arith.addf %83, %91 : vector<2x256xf32>
      %c13 = arith.constant 13 : index
      %93 = memref.load %arg2[%c13] : memref<18xf32, #tpu.memory_space<smem>>
      %94 = vector.broadcast %93 : f32 to vector<1x256xf32>
      %95 = arith.mulf %94, %84 : vector<1x256xf32>
      %96 = vector.broadcast %95 : vector<1x256xf32> to vector<2x256xf32>
      %97 = arith.mulf %96, %86 : vector<2x256xf32>
      %98 = arith.addf %92, %97 : vector<2x256xf32>
      %c5 = arith.constant 5 : index
      %c0_50 = arith.constant 0 : index
      %99 = vector.load %arg3[%c5, %c0_50] : memref<9x256xf32, #tpu.memory_space<vmem>>, vector<1x256xf32>
      %c0_51 = arith.constant 0 : index
      %c0_52 = arith.constant 0 : index
      %100 = vector.load %arg6[%c0_51, %c0_52] : memref<2x256xf32, #tpu.memory_space<vmem>>, vector<2x256xf32>
      %c255_i32 = arith.constant 255 : i32
      %101 = tpu.dynamic_rotate %100 by %c255_i32 dim 1 : vector<2x256xf32>, i32 -> vector<2x256xf32>
      %c0_53 = arith.constant 0 : index
      %c0_54 = arith.constant 0 : index
      %102 = vector.load %arg7[%c0_53, %c0_54] : memref<2x256xf32, #tpu.memory_space<vmem>>, vector<2x256xf32>
      %c255_i32_55 = arith.constant 255 : i32
      %103 = tpu.dynamic_rotate %102 by %c255_i32_55 dim 1 : vector<2x256xf32>, i32 -> vector<2x256xf32>
      %c5_56 = arith.constant 5 : index
      %104 = memref.load %arg2[%c5_56] : memref<18xf32, #tpu.memory_space<smem>>
      %105 = vector.broadcast %104 : f32 to vector<1x256xf32>
      %106 = arith.mulf %105, %99 : vector<1x256xf32>
      %107 = vector.broadcast %106 : vector<1x256xf32> to vector<2x256xf32>
      %108 = arith.mulf %107, %101 : vector<2x256xf32>
      %109 = arith.addf %98, %108 : vector<2x256xf32>
      %c14 = arith.constant 14 : index
      %110 = memref.load %arg2[%c14] : memref<18xf32, #tpu.memory_space<smem>>
      %111 = vector.broadcast %110 : f32 to vector<1x256xf32>
      %112 = arith.mulf %111, %99 : vector<1x256xf32>
      %113 = vector.broadcast %112 : vector<1x256xf32> to vector<2x256xf32>
      %114 = arith.mulf %113, %103 : vector<2x256xf32>
      %115 = arith.addf %109, %114 : vector<2x256xf32>
      %c6 = arith.constant 6 : index
      %c0_57 = arith.constant 0 : index
      %116 = vector.load %arg3[%c6, %c0_57] : memref<9x256xf32, #tpu.memory_space<vmem>>, vector<1x256xf32>
      %c0_58 = arith.constant 0 : index
      %c0_59 = arith.constant 0 : index
      %117 = vector.load %arg6[%c0_58, %c0_59] : memref<2x256xf32, #tpu.memory_space<vmem>>, vector<2x256xf32>
      %c241_i32 = arith.constant 241 : i32
      %118 = tpu.dynamic_rotate %117 by %c241_i32 dim 1 : vector<2x256xf32>, i32 -> vector<2x256xf32>
      %c0_60 = arith.constant 0 : index
      %c0_61 = arith.constant 0 : index
      %119 = vector.load %arg7[%c0_60, %c0_61] : memref<2x256xf32, #tpu.memory_space<vmem>>, vector<2x256xf32>
      %c241_i32_62 = arith.constant 241 : i32
      %120 = tpu.dynamic_rotate %119 by %c241_i32_62 dim 1 : vector<2x256xf32>, i32 -> vector<2x256xf32>
      %c6_63 = arith.constant 6 : index
      %121 = memref.load %arg2[%c6_63] : memref<18xf32, #tpu.memory_space<smem>>
      %122 = vector.broadcast %121 : f32 to vector<1x256xf32>
      %123 = arith.mulf %122, %116 : vector<1x256xf32>
      %124 = vector.broadcast %123 : vector<1x256xf32> to vector<2x256xf32>
      %125 = arith.mulf %124, %118 : vector<2x256xf32>
      %126 = arith.addf %115, %125 : vector<2x256xf32>
      %c15 = arith.constant 15 : index
      %127 = memref.load %arg2[%c15] : memref<18xf32, #tpu.memory_space<smem>>
      %128 = vector.broadcast %127 : f32 to vector<1x256xf32>
      %129 = arith.mulf %128, %116 : vector<1x256xf32>
      %130 = vector.broadcast %129 : vector<1x256xf32> to vector<2x256xf32>
      %131 = arith.mulf %130, %120 : vector<2x256xf32>
      %132 = arith.addf %126, %131 : vector<2x256xf32>
      %c7 = arith.constant 7 : index
      %c0_64 = arith.constant 0 : index
      %133 = vector.load %arg3[%c7, %c0_64] : memref<9x256xf32, #tpu.memory_space<vmem>>, vector<1x256xf32>
      %c0_65 = arith.constant 0 : index
      %c0_66 = arith.constant 0 : index
      %134 = vector.load %arg6[%c0_65, %c0_66] : memref<2x256xf32, #tpu.memory_space<vmem>>, vector<2x256xf32>
      %c240_i32 = arith.constant 240 : i32
      %135 = tpu.dynamic_rotate %134 by %c240_i32 dim 1 : vector<2x256xf32>, i32 -> vector<2x256xf32>
      %c0_67 = arith.constant 0 : index
      %c0_68 = arith.constant 0 : index
      %136 = vector.load %arg7[%c0_67, %c0_68] : memref<2x256xf32, #tpu.memory_space<vmem>>, vector<2x256xf32>
      %c240_i32_69 = arith.constant 240 : i32
      %137 = tpu.dynamic_rotate %136 by %c240_i32_69 dim 1 : vector<2x256xf32>, i32 -> vector<2x256xf32>
      %c7_70 = arith.constant 7 : index
      %138 = memref.load %arg2[%c7_70] : memref<18xf32, #tpu.memory_space<smem>>
      %139 = vector.broadcast %138 : f32 to vector<1x256xf32>
      %140 = arith.mulf %139, %133 : vector<1x256xf32>
      %141 = vector.broadcast %140 : vector<1x256xf32> to vector<2x256xf32>
      %142 = arith.mulf %141, %135 : vector<2x256xf32>
      %143 = arith.addf %132, %142 : vector<2x256xf32>
      %c16 = arith.constant 16 : index
      %144 = memref.load %arg2[%c16] : memref<18xf32, #tpu.memory_space<smem>>
      %145 = vector.broadcast %144 : f32 to vector<1x256xf32>
      %146 = arith.mulf %145, %133 : vector<1x256xf32>
      %147 = vector.broadcast %146 : vector<1x256xf32> to vector<2x256xf32>
      %148 = arith.mulf %147, %137 : vector<2x256xf32>
      %149 = arith.addf %143, %148 : vector<2x256xf32>
      %c8 = arith.constant 8 : index
      %c0_71 = arith.constant 0 : index
      %150 = vector.load %arg3[%c8, %c0_71] : memref<9x256xf32, #tpu.memory_space<vmem>>, vector<1x256xf32>
      %c0_72 = arith.constant 0 : index
      %c0_73 = arith.constant 0 : index
      %151 = vector.load %arg6[%c0_72, %c0_73] : memref<2x256xf32, #tpu.memory_space<vmem>>, vector<2x256xf32>
      %c239_i32 = arith.constant 239 : i32
      %152 = tpu.dynamic_rotate %151 by %c239_i32 dim 1 : vector<2x256xf32>, i32 -> vector<2x256xf32>
      %c0_74 = arith.constant 0 : index
      %c0_75 = arith.constant 0 : index
      %153 = vector.load %arg7[%c0_74, %c0_75] : memref<2x256xf32, #tpu.memory_space<vmem>>, vector<2x256xf32>
      %c239_i32_76 = arith.constant 239 : i32
      %154 = tpu.dynamic_rotate %153 by %c239_i32_76 dim 1 : vector<2x256xf32>, i32 -> vector<2x256xf32>
      %c8_77 = arith.constant 8 : index
      %155 = memref.load %arg2[%c8_77] : memref<18xf32, #tpu.memory_space<smem>>
      %156 = vector.broadcast %155 : f32 to vector<1x256xf32>
      %157 = arith.mulf %156, %150 : vector<1x256xf32>
      %158 = vector.broadcast %157 : vector<1x256xf32> to vector<2x256xf32>
      %159 = arith.mulf %158, %152 : vector<2x256xf32>
      %160 = arith.addf %149, %159 : vector<2x256xf32>
      %c17 = arith.constant 17 : index
      %161 = memref.load %arg2[%c17] : memref<18xf32, #tpu.memory_space<smem>>
      %162 = vector.broadcast %161 : f32 to vector<1x256xf32>
      %163 = arith.mulf %162, %150 : vector<1x256xf32>
      %164 = vector.broadcast %163 : vector<1x256xf32> to vector<2x256xf32>
      %165 = arith.mulf %164, %154 : vector<2x256xf32>
      %166 = arith.addf %160, %165 : vector<2x256xf32>
      %cst_78 = arith.constant 0.000000e+00 : f32
      %167 = vector.broadcast %cst_78 : f32 to vector<2x256xf32>
      %168 = arith.subf %167, %166 : vector<2x256xf32>
      %169 = math.exp %168 : vector<2x256xf32>
      %cst_79 = arith.constant 1.000000e+00 : f32
      %170 = vector.broadcast %cst_79 : f32 to vector<2x256xf32>
      %171 = arith.addf %170, %169 : vector<2x256xf32>
      %cst_80 = arith.constant 1.000000e+00 : f32
      %172 = vector.broadcast %cst_80 : f32 to vector<2x256xf32>
      %173 = arith.divf %172, %171 : vector<2x256xf32>
      %c0_81 = arith.constant 0 : index
      %c0_82 = arith.constant 0 : index
      %174 = vector.load %arg5[%c0_81, %c0_82] : memref<2x256xf32, #tpu.memory_space<vmem>>, vector<2x256xf32>
      tpu.vector_store %arg5[%c0_81, %c0_82], %173 {strides = array<i32>} : memref<2x256xf32, #tpu.memory_space<vmem>>, vector<2x256xf32>,
    } else {
    }
    return
  }
  func.func @transform_0(%arg0: i32, %arg1: i32) -> i32 {
    %c0_i32 = arith.constant 0 : i32
    %c0_i32_0 = arith.constant 0 : i32
    return %c0_i32 : i32
  }
  func.func @transform_1(%arg0: i32, %arg1: i32) -> (i32, i32) {
    %c0_i32 = arith.constant 0 : i32
    %c0_i32_0 = arith.constant 0 : i32
    %c0_i32_1 = arith.constant 0 : i32
    return %c0_i32, %c0_i32_0 : i32, i32
  }
  func.func @transform_2(%arg0: i32, %arg1: i32) -> (i32, i32, i32) {
    %c0_i32 = arith.constant 0 : i32
    %c0_i32_0 = arith.constant 0 : i32
    return %arg0, %arg1, %c0_i32 : i32, i32, i32
  }
  func.func @transform_3(%arg0: i32, %arg1: i32) -> (i32, i32) {
    %c0_i32 = arith.constant 0 : i32
    %c0_i32_0 = arith.constant 0 : i32
    return %arg0, %c0_i32 : i32, i32
  }
}

</mosaic_0001>

<llo_original>
// kernel: tpu_custom_call.1
$region0: #{tpu_custom_call.1}
  #allocation0 [shape = 'u32[]', space=smem, size = 0x4, offset = 0x4, fixed_abs, tag = 'smem constant byte address 0x4 - core index']
  #allocation1 [shape = 'u32[144,128]{1,0:T(1,128)}', space=vmem, size = 0x12000, scoped, tag = 'internal scratch']
  #allocation2 [shape = 'f32[2,256]{1,0:T(2,128)}', space=vmem, size = 0x800, scoped, tag = 'scratch operand']
  #allocation3 [shape = 'f32[2,256]{1,0:T(2,128)}', space=vmem, size = 0x800, scoped, tag = 'scratch operand']
  %s0 = inlined_call_operand.hbm [shape: f32[18], index: 0, kind: input, shape index: {}]
  %s1 = inlined_call_operand.hbm [shape: f32[9,256], index: 1, kind: input, shape index: {}]
  %s2 = inlined_call_operand.hbm [shape: f32[2,4,256], index: 2, kind: input, shape index: {}]
  %s3 = inlined_call_operand.hbm [shape: f32[2,256], index: 3, kind: output, shape index: {}]
  %s4 = sld [smem:[#allocation0]]
  $region42: #{tpu_custom_call.1} parent=0
    _
  %s6 = ssub.s32 1, %s4
  %s7 = scalar_select 0, %s6, %s4
  $region1: #{tpu_custom_call.1} parent=0
    #allocation4 [shape = 'u8[512]{0}', space=smem, size = 0x200, scoped, tag = 'input window, operand 0, single buffered']
    #allocation5 [shape = 's32[1]{0}', space=sflag, size = 0x4, scoped, tag = 'scoped memory for tpu_custom_call.1']
    #allocation6 [shape = 's32[1]{0}', space=sflag, size = 0x4, scoped, tag = 'scoped memory for tpu_custom_call.1']
    #allocation7 [shape = 's32[1]{0}', space=sflag, size = 0x4, scoped, tag = 'scoped memory for tpu_custom_call.1']
    #allocation8 [shape = 'u8[16384]{0}', space=vmem, size = 0x4000, scoped, tag = 'input window, operand 1, single buffered']
    #allocation9 [shape = 'u8[8192]{0}', space=vmem, size = 0x2000, scoped, tag = 'input window, operand 2, single buffered']
    #allocation10 [shape = 's32[1]{0}', space=sflag, size = 0x4, scoped, tag = 'scoped memory for tpu_custom_call.1']
    #allocation11 [shape = 'u8[2048]{0}', space=vmem, size = 0x800, scoped, tag = 'output window, operand 0, single buffered']
    %8 = vsyncpa [#allocation7], 0
    %9 = vsyncpa [#allocation5], 0
    %10 = vsyncpa [#allocation10], 0
    %11 = vsyncpa [#allocation6], 0
    // Predicated region
    $region2: #{tpu_custom_call.1} parent=1 // pred_check
      _
    $region3: #{tpu_custom_call.1} parent=1 // pred_check_branch
      %13 = sbr.rel (0) target = $region5
    $region4: #{tpu_custom_call.1} parent=1 // pred_region
      %s15 = ssub.s32 16, 16
      %16 = vsyncadd [#allocation7], %s15
      %19 = dma.hbm_to_smem %s0, 16, [#allocation4], [#allocation7]
    $region5: #{tpu_custom_call.1} parent=1 // pred_fallthru
      _
    // Predicated region
    $region6: #{tpu_custom_call.1} parent=1 // pred_check
      _
    $region7: #{tpu_custom_call.1} parent=1 // pred_check_branch
      %21 = sbr.rel (0) target = $region9
    $region8: #{tpu_custom_call.1} parent=1 // pred_region
      %s23 = ssub.s32 512, 512
      %24 = vsyncadd [#allocation5], %s23
      %s25 = sshll.u32 [#allocation8], 4
      %s26 = int_to_ptr.vmem [resolvable:$true] %s25
      %31 = dma.hbm_to_vmem [thread:$0]  %s1, 512, %s26, [#allocation5], 256, 256, 16
    $region9: #{tpu_custom_call.1} parent=1 // pred_fallthru
      _
    // Predicated region
    $region10: #{tpu_custom_call.1} parent=1 // pred_check
      _
    $region11: #{tpu_custom_call.1} parent=1 // pred_check_branch
      %33 = sbr.rel (0) target = $region13
    $region12: #{tpu_custom_call.1} parent=1 // pred_region
      %s35 = ssub.s32 256, 256
      %36 = vsyncadd [#allocation10], %s35
      %s37 = sshll.u32 [#allocation9], 4
      %s38 = int_to_ptr.vmem [resolvable:$true] %s37
      %43 = dma.hbm_to_vmem [thread:$0]  %s2, 256, %s38, [#allocation10], 128, 128, 8
    $region13: #{tpu_custom_call.1} parent=1 // pred_fallthru
      _
    // Predicated region
    $region14: #{tpu_custom_call.1} parent=1 // pred_check
      _
    $region15: #{tpu_custom_call.1} parent=1 // pred_check_branch
      %45 = sbr.rel (0) target = $region17
    $region16: #{tpu_custom_call.1} parent=1 // pred_region
      %46 = dma.done [#allocation7], 16
    $region17: #{tpu_custom_call.1} parent=1 // pred_fallthru
      _
    // Predicated region
    $region18: #{tpu_custom_call.1} parent=1 // pred_check
      _
    $region19: #{tpu_custom_call.1} parent=1 // pred_check_branch
      %48 = sbr.rel (0) target = $region21
    $region20: #{tpu_custom_call.1} parent=1 // pred_region
      %49 = dma.done [#allocation5], 512
    $region21: #{tpu_custom_call.1} parent=1 // pred_fallthru
      _
    // Predicated region
    $region22: #{tpu_custom_call.1} parent=1 // pred_check
      _
    $region23: #{tpu_custom_call.1} parent=1 // pred_check_branch
      %51 = sbr.rel (0) target = $region25
    $region24: #{tpu_custom_call.1} parent=1 // pred_region
      %52 = dma.done [#allocation10], 256
    $region25: #{tpu_custom_call.1} parent=1 // pred_fallthru
      _
    %53 = sfence
    %p54 = scmp.eq.s32.totalorder 0, 0
    // Predicated region
    $region26: #{tpu_custom_call.1} parent=1 // pred_check
      %p55 = pneg %p54
    $region27: #{tpu_custom_call.1} parent=1 // pred_check_branch
      %57 = sbr.rel (%p55) target = $region29
    $region28: #{tpu_custom_call.1} parent=1 // pred_region
      %58 = vst [vmem:[#allocation2] sm:$0xf] 0.0
      %59 = vst [vmem:[#allocation3] sm:$0xf] -inf
    $region29: #{tpu_custom_call.1} parent=1 // pred_fallthru
      _
    %v60 = vld [vmem:[#allocation9] sm:$0xff]
    %v61 = vld [vmem:[#allocation9 + $0x8] sm:$0xff]
    %v62 = vld [vmem:[#allocation2] sm:$0xf]
    %v65 = vcombine.high %v60, %v60
    %v66 = vcombine.high %v61, %v61
    %vm69 = vcmask 1043456
    %v70 = vsel %vm69, %v60, 0.0
    %v71 = vrot.slane %v70, 4
    %v72 = vadd.f32 %v70, %v71
    %v73 = vrot.slane %v72, 2
    %v74 = vadd.f32 %v72, %v73
    %v75 = vrot.slane %v74, 1
    %v76 = vadd.f32 %v74, %v75
    %v77 = vsel %vm69, %v65, 0.0
    %v78 = vrot.slane %v77, 4
    %v79 = vadd.f32 %v77, %v78
    %v80 = vrot.slane %v79, 2
    %v81 = vadd.f32 %v79, %v80
    %v82 = vrot.slane %v81, 1
    %v83 = vadd.f32 %v81, %v82
    %v84 = vsel %vm69, %v61, 0.0
    %v85 = vrot.slane %v84, 4
    %v86 = vadd.f32 %v84, %v85
    %v87 = vrot.slane %v86, 2
    %v88 = vadd.f32 %v86, %v87
    %v89 = vrot.slane %v88, 1
    %v90 = vadd.f32 %v88, %v89
    %v91 = vsel %vm69, %v66, 0.0
    %v92 = vrot.slane %v91, 4
    %v93 = vadd.f32 %v91, %v92
    %v94 = vrot.slane %v93, 2
    %v95 = vadd.f32 %v93, %v94
    %v96 = vrot.slane %v95, 1
    %v97 = vadd.f32 %v95, %v96
    %v102 = vcombine.low %v76, %v83
    %v104 = vunpack.c.l.s4 1983009808
    %v105 = vunpack.c.0.s8 %v104
    %v106 = vlaneseq
    %v107 = vshrl.u32 %v106, 7
    %v108 = vsub.s32 %v105, %v107
    %v109 = vrot.slane %v102, %v108
    %v110 = vcombine.low %v90, %v97
    %v112 = vunpack.c.l.s4 1983009808
    %v113 = vunpack.c.0.s8 %v112
    %v114 = vlaneseq
    %v115 = vshrl.u32 %v114, 7
    %v116 = vsub.s32 %v113, %v115
    %v117 = vrot.slane %v110, %v116
    %vm118 = vcmask 1044484
    %v119 = vsel %vm118, %v109, %v109
    %vm120 = vcmask 1046534
    %v121 = vsel %vm120, %v109, %v119
    %v122 = vrot.slane %v117, 7
    %vm123 = vcmask 1041409
    %v124 = vsel %vm123, %v122, %v121
    %vm125 = vcmask 1043459
    %v126 = vsel %vm125, %v122, %v124
    %vm127 = vcmask 1045509
    %v128 = vsel %vm127, %v122, %v126
    %vm129 = vcmask 1047559
    %v130 = vsel %vm129, %v122, %v128
    %v132 = vadd.f32 %v62, %v130
    %133 = vst [vmem:[#allocation2] sm:$0xf] %v132
    %v134 = vld [vmem:[#allocation3] sm:$0xf]
    %v135 = vsel %vm69, %v60, -inf
    %v136 = vrot.slane %v135, 4
    %v137 = vmax.f32 %v135, %v136
    %v138 = vrot.slane %v137, 2
    %v139 = vmax.f32 %v137, %v138
    %v140 = vrot.slane %v139, 1
    %v141 = vmax.f32 %v139, %v140
    %v142 = vsel %vm69, %v65, -inf
    %v143 = vrot.slane %v142, 4
    %v144 = vmax.f32 %v142, %v143
    %v145 = vrot.slane %v144, 2
    %v146 = vmax.f32 %v144, %v145
    %v147 = vrot.slane %v146, 1
    %v148 = vmax.f32 %v146, %v147
    %v149 = vsel %vm69, %v61, -inf
    %v150 = vrot.slane %v149, 4
    %v151 = vmax.f32 %v149, %v150
    %v152 = vrot.slane %v151, 2
    %v153 = vmax.f32 %v151, %v152
    %v154 = vrot.slane %v153, 1
    %v155 = vmax.f32 %v153, %v154
    %v156 = vsel %vm69, %v66, -inf
    %v157 = vrot.slane %v156, 4
    %v158 = vmax.f32 %v156, %v157
    %v159 = vrot.slane %v158, 2
    %v160 = vmax.f32 %v158, %v159
    %v161 = vrot.slane %v160, 1
    %v162 = vmax.f32 %v160, %v161
    %v167 = vcombine.low %v141, %v148
    %v169 = vunpack.c.l.s4 1983009808
    %v170 = vunpack.c.0.s8 %v169
    %v171 = vlaneseq
    %v172 = vshrl.u32 %v171, 7
    %v173 = vsub.s32 %v170, %v172
    %v174 = vrot.slane %v167, %v173
    %v175 = vcombine.low %v155, %v162
    %v177 = vunpack.c.l.s4 1983009808
    %v178 = vunpack.c.0.s8 %v177
    %v179 = vlaneseq
    %v180 = vshrl.u32 %v179, 7
    %v181 = vsub.s32 %v178, %v180
    %v182 = vrot.slane %v175, %v181
    %v183 = vsel %vm118, %v174, %v174
    %v184 = vsel %vm120, %v174, %v183
    %v185 = vrot.slane %v182, 7
    %v186 = vsel %vm123, %v185, %v184
    %v187 = vsel %vm125, %v185, %v186
    %v188 = vsel %vm127, %v185, %v187
    %v189 = vsel %vm129, %v185, %v188
    %v191 = vmax.f32 %v134, %v189
    %192 = vst [vmem:[#allocation3] sm:$0xf] %v191
    // Predicated region
    $region30: #{tpu_custom_call.1} parent=1 // pred_check
      %p193 = pneg %p54
    $region31: #{tpu_custom_call.1} parent=1 // pred_check_branch
      %195 = sbr.rel (%p193) target = $region33
    $region32: #{tpu_custom_call.1} parent=1 // pred_region
      %v196 = vld [vmem:[#allocation8] ss:$8 sm:$0x3]
      %v197 = vld [vmem:[#allocation2] sm:$0xf]
      %v200 = vunpack.c.l.s4 1983009808
      %v201 = vunpack.c.0.s8 %v200
      %v202 = vlaneseq
      %v203 = vshrl.u32 %v202, 7
      %v204 = vsub.s32 %v201, %v203
      %v205 = vrot.slane %v197, %v204
      %v206 = vcombine.high %v205, %v205
      %209 = vrot.lane.b32.xlu0 %v205, 17
      %v210 = vpop.permute.xlu0 %209
      %211 = vrot.lane.b32.xlu0 %v206, 17
      %v212 = vpop.permute.xlu0 %211
      %v213 = vlaneseq
      %v214 = vand.u32 %v213, 127
      %vm215 = vcmp.lt.s32.totalorder %v214, 17
      %v216 = vsel %vm215, %v210, %v212
      %v217 = vsel %vm215, %v212, %v210
      %v218 = vld [vmem:[#allocation3] sm:$0xf]
      %v221 = vunpack.c.l.s4 1983009808
      %v222 = vunpack.c.0.s8 %v221
      %v223 = vlaneseq
      %v224 = vshrl.u32 %v223, 7
      %v225 = vsub.s32 %v222, %v224
      %v226 = vrot.slane %v218, %v225
      %v227 = vcombine.high %v226, %v226
      %230 = vrot.lane.b32.xlu0 %v226, 17
      %v231 = vpop.permute.xlu0 %230
      %232 = vrot.lane.b32.xlu0 %v227, 17
      %v233 = vpop.permute.xlu0 %232
      %v234 = vsel %vm215, %v231, %v233
      %v235 = vsel %vm215, %v233, %v231
      %s236 = sld [smem:[#allocation4]]
      %v237 = vstv %s236
      %v238 = vmul.f32 %v237, %v196
      %v240 = vlaneseq
      %v241 = vshrl.u32 %v240, 7
      %v242 = vsub.s32 0, %v241
      %v243 = vrot.slane %v238, %v242
      %v244 = vlaneseq
      %v245 = vshrl.u32 %v244, 7
      %v246 = vsub.s32 1, %v245
      %v247 = vrot.slane %v238, %v246
      %v250 = vmul.f32 %v243, %v217
      %v251 = vmul.f32 %v247, %v216
      %v252 = vadd.f32 %v250, 0.0
      %v253 = vadd.f32 %v251, 0.0
      %s254 = sld [smem:[#allocation4 + $0x9]]
      %v255 = vstv %s254
      %v256 = vmul.f32 %v255, %v196
      %v258 = vlaneseq
      %v259 = vshrl.u32 %v258, 7
      %v260 = vsub.s32 0, %v259
      %v261 = vrot.slane %v256, %v260
      %v262 = vlaneseq
      %v263 = vshrl.u32 %v262, 7
      %v264 = vsub.s32 1, %v263
      %v265 = vrot.slane %v256, %v264
      %v268 = vmul.f32 %v261, %v235
      %v269 = vmul.f32 %v265, %v234
      %v270 = vadd.f32 %v252, %v268
      %v271 = vadd.f32 %v253, %v269
      %s272 = scalar_lea.vmem [#allocation8], 1
      %v273 = vld [vmem:[%s272] ss:$8 sm:$0x3]
      %274 = vrot.lane.b32.xlu0 %v205, 16
      %v275 = vpop.permute.xlu0 %274
      %276 = vrot.lane.b32.xlu0 %v206, 16
      %v277 = vpop.permute.xlu0 %276
      %vm278 = vcmp.lt.s32.totalorder %v214, 16
      %v279 = vsel %vm278, %v275, %v277
      %v280 = vsel %vm278, %v277, %v275
      %281 = vrot.lane.b32.xlu0 %v226, 16
      %v282 = vpop.permute.xlu0 %281
      %283 = vrot.lane.b32.xlu0 %v227, 16
      %v284 = vpop.permute.xlu0 %283
      %v285 = vsel %vm278, %v282, %v284
      %v286 = vsel %vm278, %v284, %v282
      %s287 = sld [smem:[#allocation4 + $0x1]]
      %v288 = vstv %s287
      %v289 = vmul.f32 %v288, %v273
      %v291 = vlaneseq
      %v292 = vshrl.u32 %v291, 7
      %v293 = vsub.s32 0, %v292
      %v294 = vrot.slane %v289, %v293
      %v295 = vlaneseq
      %v296 = vshrl.u32 %v295, 7
      %v297 = vsub.s32 1, %v296
      %v298 = vrot.slane %v289, %v297
      %v301 = vmul.f32 %v294, %v280
      %v302 = vmul.f32 %v298, %v279
      %v303 = vadd.f32 %v270, %v301
      %v304 = vadd.f32 %v271, %v302
      %s305 = sld [smem:[#allocation4 + $0xa]]
      %v306 = vstv %s305
      %v307 = vmul.f32 %v306, %v273
      %v309 = vlaneseq
      %v310 = vshrl.u32 %v309, 7
      %v311 = vsub.s32 0, %v310
      %v312 = vrot.slane %v307, %v311
      %v313 = vlaneseq
      %v314 = vshrl.u32 %v313, 7
      %v315 = vsub.s32 1, %v314
      %v316 = vrot.slane %v307, %v315
      %v319 = vmul.f32 %v312, %v286
      %v320 = vmul.f32 %v316, %v285
      %v321 = vadd.f32 %v303, %v319
      %v322 = vadd.f32 %v304, %v320
      %s323 = scalar_lea.vmem [#allocation8], 2
      %v324 = vld [vmem:[%s323] ss:$8 sm:$0x3]
      %325 = vrot.lane.b32.xlu0 %v205, 15
      %v326 = vpop.permute.xlu0 %325
      %327 = vrot.lane.b32.xlu0 %v206, 15
      %v328 = vpop.permute.xlu0 %327
      %vm329 = vcmp.lt.s32.totalorder %v214, 15
      %v330 = vsel %vm329, %v326, %v328
      %v331 = vsel %vm329, %v328, %v326
      %332 = vrot.lane.b32.xlu0 %v226, 15
      %v333 = vpop.permute.xlu0 %332
      %334 = vrot.lane.b32.xlu0 %v227, 15
      %v335 = vpop.permute.xlu0 %334
      %v336 = vsel %vm329, %v333, %v335
      %v337 = vsel %vm329, %v335, %v333
      %s338 = sld [smem:[#allocation4 + $0x2]]
      %v339 = vstv %s338
      %v340 = vmul.f32 %v339, %v324
      %v342 = vlaneseq
      %v343 = vshrl.u32 %v342, 7
      %v344 = vsub.s32 0, %v343
      %v345 = vrot.slane %v340, %v344
      %v346 = vlaneseq
      %v347 = vshrl.u32 %v346, 7
      %v348 = vsub.s32 1, %v347
      %v349 = vrot.slane %v340, %v348
      %v352 = vmul.f32 %v345, %v331
      %v353 = vmul.f32 %v349, %v330
      %v354 = vadd.f32 %v321, %v352
      %v355 = vadd.f32 %v322, %v353
      %s356 = sld [smem:[#allocation4 + $0xb]]
      %v357 = vstv %s356
      %v358 = vmul.f32 %v357, %v324
      %v360 = vlaneseq
      %v361 = vshrl.u32 %v360, 7
      %v362 = vsub.s32 0, %v361
      %v363 = vrot.slane %v358, %v362
      %v364 = vlaneseq
      %v365 = vshrl.u32 %v364, 7
      %v366 = vsub.s32 1, %v365
      %v367 = vrot.slane %v358, %v366
      %v370 = vmul.f32 %v363, %v337
      %v371 = vmul.f32 %v367, %v336
      %v372 = vadd.f32 %v354, %v370
      %v373 = vadd.f32 %v355, %v371
      %s374 = scalar_lea.vmem [#allocation8], 3
      %v375 = vld [vmem:[%s374] ss:$8 sm:$0x3]
      %376 = vrot.lane.b32.xlu0 %v205, 1
      %v377 = vpop.permute.xlu0 %376
      %378 = vrot.lane.b32.xlu0 %v206, 1
      %v379 = vpop.permute.xlu0 %378
      %vm380 = vcmp.lt.s32.totalorder %v214, 1
      %v381 = vsel %vm380, %v377, %v379
      %v382 = vsel %vm380, %v379, %v377
      %383 = vrot.lane.b32.xlu0 %v226, 1
      %v384 = vpop.permute.xlu0 %383
      %385 = vrot.lane.b32.xlu0 %v227, 1
      %v386 = vpop.permute.xlu0 %385
      %v387 = vsel %vm380, %v384, %v386
      %v388 = vsel %vm380, %v386, %v384
      %s389 = sld [smem:[#allocation4 + $0x3]]
      %v390 = vstv %s389
      %v391 = vmul.f32 %v390, %v375
      %v393 = vlaneseq
      %v394 = vshrl.u32 %v393, 7
      %v395 = vsub.s32 0, %v394
      %v396 = vrot.slane %v391, %v395
      %v397 = vlaneseq
      %v398 = vshrl.u32 %v397, 7
      %v399 = vsub.s32 1, %v398
      %v400 = vrot.slane %v391, %v399
      %v403 = vmul.f32 %v396, %v382
      %v404 = vmul.f32 %v400, %v381
      %v405 = vadd.f32 %v372, %v403
      %v406 = vadd.f32 %v373, %v404
      %s407 = sld [smem:[#allocation4 + $0xc]]
      %v408 = vstv %s407
      %v409 = vmul.f32 %v408, %v375
      %v411 = vlaneseq
      %v412 = vshrl.u32 %v411, 7
      %v413 = vsub.s32 0, %v412
      %v414 = vrot.slane %v409, %v413
      %v415 = vlaneseq
      %v416 = vshrl.u32 %v415, 7
      %v417 = vsub.s32 1, %v416
      %v418 = vrot.slane %v409, %v417
      %v421 = vmul.f32 %v414, %v388
      %v422 = vmul.f32 %v418, %v387
      %v423 = vadd.f32 %v405, %v421
      %v424 = vadd.f32 %v406, %v422
      %s425 = scalar_lea.vmem [#allocation8], 4
      %v426 = vld [vmem:[%s425] ss:$8 sm:$0x3]
      %s427 = sld [smem:[#allocation4 + $0x4]]
      %v428 = vstv %s427
      %v429 = vmul.f32 %v428, %v426
      %v431 = vlaneseq
      %v432 = vshrl.u32 %v431, 7
      %v433 = vsub.s32 0, %v432
      %v434 = vrot.slane %v429, %v433
      %v435 = vlaneseq
      %v436 = vshrl.u32 %v435, 7
      %v437 = vsub.s32 1, %v436
      %v438 = vrot.slane %v429, %v437
      %v441 = vmul.f32 %v434, %v205
      %v442 = vmul.f32 %v438, %v206
      %v443 = vadd.f32 %v423, %v441
      %v444 = vadd.f32 %v424, %v442
      %s445 = sld [smem:[#allocation4 + $0xd]]
      %v446 = vstv %s445
      %v447 = vmul.f32 %v446, %v426
      %v449 = vlaneseq
      %v450 = vshrl.u32 %v449, 7
      %v451 = vsub.s32 0, %v450
      %v452 = vrot.slane %v447, %v451
      %v453 = vlaneseq
      %v454 = vshrl.u32 %v453, 7
      %v455 = vsub.s32 1, %v454
      %v456 = vrot.slane %v447, %v455
      %v459 = vmul.f32 %v452, %v226
      %v460 = vmul.f32 %v456, %v227
      %v461 = vadd.f32 %v443, %v459
      %v462 = vadd.f32 %v444, %v460
      %s463 = scalar_lea.vmem [#allocation8], 5
      %v464 = vld [vmem:[%s463] ss:$8 sm:$0x3]
      %465 = vrot.lane.b32.xlu0 %v205, 127
      %v466 = vpop.permute.xlu0 %465
      %467 = vrot.lane.b32.xlu0 %v206, 127
      %v468 = vpop.permute.xlu0 %467
      %vm469 = vcmp.lt.s32.totalorder %v214, 127
      %v470 = vsel %vm469, %v466, %v468
      %v471 = vsel %vm469, %v468, %v466
      %472 = vrot.lane.b32.xlu0 %v226, 127
      %v473 = vpop.permute.xlu0 %472
      %474 = vrot.lane.b32.xlu0 %v227, 127
      %v475 = vpop.permute.xlu0 %474
      %v476 = vsel %vm469, %v473, %v475
      %v477 = vsel %vm469, %v475, %v473
      %s478 = sld [smem:[#allocation4 + $0x5]]
      %v479 = vstv %s478
      %v480 = vmul.f32 %v479, %v464
      %v482 = vlaneseq
      %v483 = vshrl.u32 %v482, 7
      %v484 = vsub.s32 0, %v483
      %v485 = vrot.slane %v480, %v484
      %v486 = vlaneseq
      %v487 = vshrl.u32 %v486, 7
      %v488 = vsub.s32 1, %v487
      %v489 = vrot.slane %v480, %v488
      %v492 = vmul.f32 %v485, %v470
      %v493 = vmul.f32 %v489, %v471
      %v494 = vadd.f32 %v461, %v492
      %v495 = vadd.f32 %v462, %v493
      %s496 = sld [smem:[#allocation4 + $0xe]]
      %v497 = vstv %s496
      %v498 = vmul.f32 %v497, %v464
      %v500 = vlaneseq
      %v501 = vshrl.u32 %v500, 7
      %v502 = vsub.s32 0, %v501
      %v503 = vrot.slane %v498, %v502
      %v504 = vlaneseq
      %v505 = vshrl.u32 %v504, 7
      %v506 = vsub.s32 1, %v505
      %v507 = vrot.slane %v498, %v506
      %v510 = vmul.f32 %v503, %v476
      %v511 = vmul.f32 %v507, %v477
      %v512 = vadd.f32 %v494, %v510
      %v513 = vadd.f32 %v495, %v511
      %s514 = scalar_lea.vmem [#allocation8], 6
      %v515 = vld [vmem:[%s514] ss:$8 sm:$0x3]
      %516 = vrot.lane.b32.xlu0 %v205, 113
      %v517 = vpop.permute.xlu0 %516
      %518 = vrot.lane.b32.xlu0 %v206, 113
      %v519 = vpop.permute.xlu0 %518
      %vm520 = vcmp.lt.s32.totalorder %v214, 113
      %v521 = vsel %vm520, %v517, %v519
      %v522 = vsel %vm520, %v519, %v517
      %523 = vrot.lane.b32.xlu0 %v226, 113
      %v524 = vpop.permute.xlu0 %523
      %525 = vrot.lane.b32.xlu0 %v227, 113
      %v526 = vpop.permute.xlu0 %525
      %v527 = vsel %vm520, %v524, %v526
      %v528 = vsel %vm520, %v526, %v524
      %s529 = sld [smem:[#allocation4 + $0x6]]
      %v530 = vstv %s529
      %v531 = vmul.f32 %v530, %v515
      %v533 = vlaneseq
      %v534 = vshrl.u32 %v533, 7
      %v535 = vsub.s32 0, %v534
      %v536 = vrot.slane %v531, %v535
      %v537 = vlaneseq
      %v538 = vshrl.u32 %v537, 7
      %v539 = vsub.s32 1, %v538
      %v540 = vrot.slane %v531, %v539
      %v543 = vmul.f32 %v536, %v521
      %v544 = vmul.f32 %v540, %v522
      %v545 = vadd.f32 %v512, %v543
      %v546 = vadd.f32 %v513, %v544
      %s547 = sld [smem:[#allocation4 + $0xf]]
      %v548 = vstv %s547
      %v549 = vmul.f32 %v548, %v515
      %v551 = vlaneseq
      %v552 = vshrl.u32 %v551, 7
      %v553 = vsub.s32 0, %v552
      %v554 = vrot.slane %v549, %v553
      %v555 = vlaneseq
      %v556 = vshrl.u32 %v555, 7
      %v557 = vsub.s32 1, %v556
      %v558 = vrot.slane %v549, %v557
      %v561 = vmul.f32 %v554, %v527
      %v562 = vmul.f32 %v558, %v528
      %v563 = vadd.f32 %v545, %v561
      %v564 = vadd.f32 %v546, %v562
      %s565 = scalar_lea.vmem [#allocation8], 7
      %v566 = vld [vmem:[%s565] ss:$8 sm:$0x3]
      %567 = vrot.lane.b32.xlu0 %v205, 112
      %v568 = vpop.permute.xlu0 %567
      %569 = vrot.lane.b32.xlu0 %v206, 112
      %v570 = vpop.permute.xlu0 %569
      %vm571 = vcmp.lt.s32.totalorder %v214, 112
      %v572 = vsel %vm571, %v568, %v570
      %v573 = vsel %vm571, %v570, %v568
      %574 = vrot.lane.b32.xlu0 %v226, 112
      %v575 = vpop.permute.xlu0 %574
      %576 = vrot.lane.b32.xlu0 %v227, 112
      %v577 = vpop.permute.xlu0 %576
      %v578 = vsel %vm571, %v575, %v577
      %v579 = vsel %vm571, %v577, %v575
      %s580 = sld [smem:[#allocation4 + $0x7]]
      %v581 = vstv %s580
      %v582 = vmul.f32 %v581, %v566
      %v584 = vlaneseq
      %v585 = vshrl.u32 %v584, 7
      %v586 = vsub.s32 0, %v585
      %v587 = vrot.slane %v582, %v586
      %v588 = vlaneseq
      %v589 = vshrl.u32 %v588, 7
      %v590 = vsub.s32 1, %v589
      %v591 = vrot.slane %v582, %v590
      %v594 = vmul.f32 %v587, %v572
      %v595 = vmul.f32 %v591, %v573
      %v596 = vadd.f32 %v563, %v594
      %v597 = vadd.f32 %v564, %v595
      %s598 = sld [smem:[#allocation4 + $0x10]]
      %v599 = vstv %s598
      %v600 = vmul.f32 %v599, %v566
      %v602 = vlaneseq
      %v603 = vshrl.u32 %v602, 7
      %v604 = vsub.s32 0, %v603
      %v605 = vrot.slane %v600, %v604
      %v606 = vlaneseq
      %v607 = vshrl.u32 %v606, 7
      %v608 = vsub.s32 1, %v607
      %v609 = vrot.slane %v600, %v608
      %v612 = vmul.f32 %v605, %v578
      %v613 = vmul.f32 %v609, %v579
      %v614 = vadd.f32 %v596, %v612
      %v615 = vadd.f32 %v597, %v613
      %s616 = scalar_lea.vmem [#allocation8], 16
      %v617 = vld [vmem:[%s616] ss:$8 sm:$0x3]
      %618 = vrot.lane.b32.xlu0 %v205, 111
      %v619 = vpop.permute.xlu0 %618
      %620 = vrot.lane.b32.xlu0 %v206, 111
      %v621 = vpop.permute.xlu0 %620
      %vm622 = vcmp.lt.s32.totalorder %v214, 111
      %v623 = vsel %vm622, %v619, %v621
      %v624 = vsel %vm622, %v621, %v619
      %625 = vrot.lane.b32.xlu0 %v226, 111
      %v626 = vpop.permute.xlu0 %625
      %627 = vrot.lane.b32.xlu0 %v227, 111
      %v628 = vpop.permute.xlu0 %627
      %v629 = vsel %vm622, %v626, %v628
      %v630 = vsel %vm622, %v628, %v626
      %s631 = sld [smem:[#allocation4 + $0x8]]
      %v632 = vstv %s631
      %v633 = vmul.f32 %v632, %v617
      %v635 = vlaneseq
      %v636 = vshrl.u32 %v635, 7
      %v637 = vsub.s32 0, %v636
      %v638 = vrot.slane %v633, %v637
      %v639 = vlaneseq
      %v640 = vshrl.u32 %v639, 7
      %v641 = vsub.s32 1, %v640
      %v642 = vrot.slane %v633, %v641
      %v645 = vmul.f32 %v638, %v623
      %v646 = vmul.f32 %v642, %v624
      %v647 = vadd.f32 %v614, %v645
      %v648 = vadd.f32 %v615, %v646
      %s649 = sld [smem:[#allocation4 + $0x11]]
      %v650 = vstv %s649
      %v651 = vmul.f32 %v650, %v617
      %v653 = vlaneseq
      %v654 = vshrl.u32 %v653, 7
      %v655 = vsub.s32 0, %v654
      %v656 = vrot.slane %v651, %v655
      %v657 = vlaneseq
      %v658 = vshrl.u32 %v657, 7
      %v659 = vsub.s32 1, %v658
      %v660 = vrot.slane %v651, %v659
      %v663 = vmul.f32 %v656, %v629
      %v664 = vmul.f32 %v660, %v630
      %v665 = vadd.f32 %v647, %v663
      %v666 = vadd.f32 %v648, %v664
      %v667 = vsub.f32 0.0, %v665
      %v668 = vsub.f32 0.0, %v666
      %v669 = vmul.f32 %v667, 1.442695
      %v670 = vpow.pop %v669
      %v671 = vmul.f32 %v668, 1.442695
      %v672 = vpow.pop %v671
      %v673 = vadd.f32 %v670, 1.0
      %v674 = vadd.f32 %v672, 1.0
      %v675 = vrcp.pop %v673
      %v676 = vmul.f32 1.0, %v675
      %v677 = vrcp.pop %v674
      %v678 = vmul.f32 1.0, %v677
      %v681 = vcombine.low %v676, %v678
      %v683 = vunpack.c.l.s4 1983009808
      %v684 = vunpack.c.0.s8 %v683
      %v685 = vlaneseq
      %v686 = vshrl.u32 %v685, 7
      %v687 = vsub.s32 %v684, %v686
      %v688 = vrot.slane %v681, %v687
      %690 = vst [vmem:[#allocation11] sm:$0xf] %v688
    $region33: #{tpu_custom_call.1} parent=1 // pred_fallthru
      _
    // Predicated region
    $region34: #{tpu_custom_call.1} parent=1 // pred_check
      _
    $region35: #{tpu_custom_call.1} parent=1 // pred_check_branch
      %692 = sbr.rel (0) target = $region37
    $region36: #{tpu_custom_call.1} parent=1 // pred_region
      %s694 = ssub.s32 64, 64
      %695 = vsyncadd [#allocation6], %s694
      %s697 = sshll.u32 [#allocation11], 4
      %s698 = int_to_ptr.vmem [resolvable:$true] %s697
      %700 = dma.vmem_to_hbm [thread:$0]  %s698, 64, %s3, [#allocation6]
    $region37: #{tpu_custom_call.1} parent=1 // pred_fallthru
      _
    // Predicated region
    $region38: #{tpu_custom_call.1} parent=1 // pred_check
      _
    $region39: #{tpu_custom_call.1} parent=1 // pred_check_branch
      %702 = sbr.rel (0) target = $region41
    $region40: #{tpu_custom_call.1} parent=1 // pred_region
      %703 = dma.done [#allocation6], 64
    $region41: #{tpu_custom_call.1} parent=1 // pred_fallthru
      _
    %704 = vsyncpa [#allocation5], 1
    %705 = vsyncpa [#allocation10], 1
    %706 = vsyncpa [#allocation6], 1
    %707 = vsyncpa [#allocation7], 1

</llo_original>
